<compile_context>
chip_gen: v6e
topology: v6e:2x2x1
jax: 0.10.0
libtpu: 0.0.40
codegen_flags: <defaults>
</compile_context>

<pallas_src>
import functools

import jax
import jax.numpy as jnp
import numpy as np
from jax import lax
from jax.experimental import pallas as pl
from jax.experimental.pallas import tpu as pltpu

LRELU_SLOPE = 0.1


def _round_up(x, m):
    return ((x + m - 1) // m) * m


def _pick_gb(groups):
    """Groups packed (block-diagonally) into one matmul per tile."""
    if groups <= 16:
        return groups
    assert groups % 16 == 0, f"group count {groups} must be a multiple of 16"
    return 16


# ------------------------------ Pallas kernel ------------------------------ #
def _conv_kernel(w_ref, b_ref, xa_ref, xh_ref, o_ref, *, Q, W, slope, apply_act):
    """One (R, TN) output tile of fused grouped conv + bias + leaky_relu.

    w_ref : (1, R, Kd)    bf16  block-diagonal weights, R = Gb*Cog, Kd = Gb*Q*CpS
    b_ref : (1, R, 1)     f32
    xa_ref: (Gb, CpS, TN) bf16  main input lane block
    xh_ref: (Gb, CpS,128) bf16  next 128 lanes of the same array (tap halo)
    o_ref : (1, R, TN)    bf16
    Tap q reads the input lanes shifted by q*W (W = inner width of the (K,1) conv;
    1 for the 1-D discriminator-S convs).  All Q taps and all Gb groups are folded
    into a SINGLE MXU contraction of depth Kd.
    """
    Gb, CpS, TN = xa_ref.shape
    xa = xa_ref[...]
    if Q > 1:
        window = jnp.concatenate([xa, xh_ref[...]], axis=-1)           # (Gb,CpS,TN+128)
        taps = [lax.slice_in_dim(window, q * W, q * W + TN, axis=2) for q in range(Q)]
        xs = jnp.stack(taps, axis=1)                                    # (Gb,Q,CpS,TN)
    else:
        xs = xa[:, None]
    xs = xs.reshape(Gb * Q * CpS, TN)                                   # rows = (g,q,c)
    acc = jnp.dot(w_ref[0], xs, preferred_element_type=jnp.float32)     # (R, TN)
    acc = acc + b_ref[0]
    if apply_act:
        acc = jnp.where(acc >= 0.0, acc, acc * slope)
    o_ref[0] = acc.astype(o_ref.dtype)


# --------------------------- weight packing (init) -------------------------- #
def pack_conv(w, b, stride, groups, gb):
    """Phase-decompose + block-diagonal-pack a (K,1)/1-D conv weight.

    w : (Cout, Cin_g, K) f32 raw weight (weight_norm forward == raw weight).
    Returns wq : (n_gb, gb*Cog, gb*Q*CpS) bf16 (block-diag over the gb groups per tile,
                 columns ordered (group, tap, cin_g*stride+phase) to match the kernel)
            bq : (n_gb, gb*Cog, 1) f32.
    """
    Cout, Cin_g, K = w.shape
    G = groups
    Cog = Cout // G
    s = stride
    Q = -(-K // s)
    CpS = Cin_g * s
    assert G % gb == 0
    n_gb = G // gb
    # zero-pad the tap axis to Q*s: phantom taps get zero weights, and the input is
    # zero-right-padded, so phantom reads contribute nothing (do not change either side
    # of this invariant independently).
    wq = jnp.pad(w, ((0, 0), (0, 0), (0, Q * s - K)))
    wq = wq.reshape(G, Cog, Cin_g, Q, s)
    wq = jnp.transpose(wq, (0, 1, 3, 2, 4)).reshape(G, Cog, Q * CpS)    # cols (q, c)
    wq = wq.reshape(n_gb, gb, Cog, Q * CpS)
    eye = jnp.eye(gb, dtype=wq.dtype)
    # rows (g, o), cols (h, q, c); zero when g != h  -> block-diagonal per tile
    wbd = jnp.einsum("ngok,gh->ngohk", wq, eye)
    wbd = wbd.reshape(n_gb, gb * Cog, gb * Q * CpS).astype(jnp.bfloat16)
    bq = b.reshape(n_gb, gb * Cog, 1).astype(jnp.float32)
    return wbd, bq


# ------------------------------ conv wrapper ------------------------------- #
def conv_core(x, wq, bq, *, K, stride, padding, groups, gb, apply_act):
    """Grouped conv along H of x:(B, Cin, H, Wd) with kernel (K,1), stride (s,1),
    padding (p,0).  wq/bq packed by pack_conv.  Returns bf16 (B, Cout, Hout, Wd)."""
    B, Cin, H, Wd = x.shape
    n_gb, R, Kd = wq.shape
    G = groups
    Cin_g = Cin // G
    Cog = R // gb
    Cout = G * Cog
    s = stride
    Hout = (H + 2 * padding - K) // s + 1
    assert Hout >= 1
    Q = -(-K // s)
    CpS = Cin_g * s
    assert Kd == gb * Q * CpS and G == n_gb * gb
    halo = (Q - 1) * Wd
    assert halo <= 128, "tap halo must fit inside one 128-lane block"

    out_lanes = Hout * Wd
    tn_cap = 512 if CpS >= 512 else 1024
    TN = min(tn_cap, _round_up(out_lanes, 128))
    n_tb = -(-out_lanes // TN)

    # --- phase-decompose the H axis (stride -> 1); no K-fold HBM expansion ---
    x = x.astype(jnp.bfloat16)
    H_ph = max(Hout + Q, -(-(H + 2 * padding) // s))
    right = H_ph * s - H - padding
    assert right >= 0
    xp = jnp.pad(x, ((0, 0), (0, 0), (padding, right), (0, 0)))
    xp = xp.reshape(B, Cin, H_ph, s, Wd)
    xp = jnp.transpose(xp, (0, 1, 3, 2, 4))                    # (B, Cin, s, H_ph, Wd)
    xp = xp.reshape(B * G, CpS, H_ph * Wd)
    lane_in = H_ph * Wd
    L_in = n_tb * TN + 128                                      # main tiles + halo block
    if lane_in < L_in:
        xp = jnp.pad(xp, ((0, 0), (0, 0), (0, L_in - lane_in)))
    elif lane_in > L_in:
        xp = xp[:, :, :L_in]                                    # never-read tail lanes

    m_blocks = B * n_gb
    if n_gb == 1:
        w_map = lambda m, j: (0, 0, 0)
        b_map = lambda m, j: (0, 0, 0)
    else:
        w_map = lambda m, j: (m % n_gb, 0, 0)
        b_map = lambda m, j: (m % n_gb, 0, 0)

    kernel = functools.partial(_conv_kernel, Q=Q, W=Wd,
                               slope=LRELU_SLOPE, apply_act=apply_act)
    flops = 2 * m_blocks * n_tb * R * Kd * TN
    bytes_accessed = (int(xp.size) * 2 + m_blocks * R * n_tb * TN * 2
                      + int(wq.size) * 2 + int(bq.size) * 4)

    out = pl.pallas_call(
        kernel,
        out_shape=jax.ShapeDtypeStruct((m_blocks, R, n_tb * TN), jnp.bfloat16),
        grid=(m_blocks, n_tb),
        in_specs=[
            pl.BlockSpec((1, R, Kd), w_map),
            pl.BlockSpec((1, R, 1), b_map),
            pl.BlockSpec((gb, CpS, TN), lambda m, j: (m, 0, j)),
            pl.BlockSpec((gb, CpS, 128), lambda m, j: (m, 0, (j + 1) * (TN // 128))),
        ],
        out_specs=pl.BlockSpec((1, R, TN), lambda m, j: (m, 0, j)),
        compiler_params=pltpu.CompilerParams(
            dimension_semantics=("parallel", "parallel"),
            vmem_limit_bytes=64 * 1024 * 1024,
        ),
        cost_estimate=pl.CostEstimate(flops=flops, transcendentals=0,
                                      bytes_accessed=bytes_accessed),
    )(wq, bq, xp, xp)

    out = out[:, :, :out_lanes]
    # rows are ordered (b, group_block, group_in_block, cog) == (b, cout)
    return out.reshape(B, Cout, Hout, Wd)


def conv_kx1(x, w, b, stride, padding, groups, apply_act):
    """Convenience wrapper (packs weights on the fly) — used only by the unit tests."""
    gb = _pick_gb(groups)
    wq, bq = pack_conv(w, b, stride, groups, gb)
    return conv_core(x, wq, bq, K=w.shape[-1], stride=stride, padding=padding,
                     groups=groups, gb=gb, apply_act=apply_act)


# ------------------------------- parameters -------------------------------- #
def _init_conv(key, shape):
    fan_in = int(np.prod(shape[1:]))
    w = jax.random.normal(key, shape, jnp.float32) / np.sqrt(fan_in)
    b = jnp.zeros((shape[0],), jnp.float32)
    return w, b


DISC_S_CFG = [
    # (cin, cout, k, stride, groups, pad)
    (1, 16, 15, 1, 1, 7),
    (16, 64, 41, 4, 4, 20),
    (64, 256, 41, 4, 16, 20),
    (256, 1024, 41, 4, 64, 20),
    (1024, 1024, 41, 4, 256, 20),
    (1024, 1024, 5, 1, 1, 2),
]

DISC_P_CFG = [
    # (cin, cout, k, stride, pad)    kernel_size=5 -> get_padding(5,1)=2
    (1, 32, 5, 3, 2),
    (32, 128, 5, 3, 2),
    (128, 512, 5, 3, 2),
    (512, 1024, 5, 3, 2),
    (1024, 1024, 5, 1, 2),
]

PERIODS = [2, 3, 5, 7, 11]


def init_disc_s(key):
    keys = jax.random.split(key, len(DISC_S_CFG) + 1)
    convs = [_init_conv(keys[i], (co, ci // g, k))
             for i, (ci, co, k, s, g, p) in enumerate(DISC_S_CFG)]
    post = _init_conv(keys[-1], (1, 1024, 3))
    return {"convs": convs, "conv_post": post}


def init_disc_p(key):
    keys = jax.random.split(key, len(DISC_P_CFG) + 1)
    convs = [_init_conv(keys[i], (co, ci, k))
             for i, (ci, co, k, s, p) in enumerate(DISC_P_CFG)]
    post = _init_conv(keys[-1], (1, 1024, 3))
    return {"convs": convs, "conv_post": post}


def init_mpd(key):
    keys = jax.random.split(key, 1 + len(PERIODS))
    return {"s": init_disc_s(keys[0]),
            "p": [init_disc_p(keys[1 + i]) for i in range(len(PERIODS))]}


def pack_mpd(raw):
    """One-time weight packing (review #8): done at init, not per forward."""
    def pack_layer(w, b, stride, groups):
        gb = _pick_gb(groups)
        wq, bq = pack_conv(w, b, stride, groups, gb)
        return {"wq": wq, "bq": bq}

    s_layers = [pack_layer(w, b, s, g)
                for (ci, co, k, s, g, p), (w, b) in zip(DISC_S_CFG, raw["s"]["convs"])]
    s_post = pack_layer(*raw["s"]["conv_post"], 1, 1)
    packed_p = []
    for pp in raw["p"]:
        layers = [pack_layer(w, b, s, 1)
                  for (ci, co, k, s, p), (w, b) in zip(DISC_P_CFG, pp["convs"])]
        packed_p.append({"convs": layers, "post": pack_layer(*pp["conv_post"], 1, 1)})
    return {"s": {"convs": s_layers, "post": s_post}, "p": packed_p}


# -------------------------------- forwards --------------------------------- #
def disc_s_forward(packed, x):
    fmap = []
    h = x[..., None]                                      # (B, 1, T, 1)
    for (ci, co, k, s, g, p), layer in zip(DISC_S_CFG, packed["convs"]):
        h = conv_core(h, layer["wq"], layer["bq"], K=k, stride=s, padding=p,
                      groups=g, gb=_pick_gb(g), apply_act=True)
        fmap.append(h[..., 0])                            # (B, C, T')
    post = packed["post"]
    h = conv_core(h, post["wq"], post["bq"], K=3, stride=1, padding=1,
                  groups=1, gb=1, apply_act=False)
    fmap.append(h[..., 0])
    return h[..., 0].reshape(h.shape[0], -1), fmap


def disc_p_forward(packed, period, x):
    fmap = []
    b_, c_, t_ = x.shape
    if t_ % period != 0:
        n_pad = period - t_ % period
        assert n_pad < t_, "reflect padding requires n_pad < T"
        x = jnp.pad(x, ((0, 0), (0, 0), (0, n_pad)), mode="reflect")
        t_ = t_ + n_pad
    h = x.reshape(b_, c_, t_ // period, period)
    for (ci, co, k, s, p), layer in zip(DISC_P_CFG, packed["convs"]):
        h = conv_core(h, layer["wq"], layer["bq"], K=k, stride=s, padding=p,
                      groups=1, gb=1, apply_act=True)
        fmap.append(h)
    post = packed["post"]
    h = conv_core(h, post["wq"], post["bq"], K=3, stride=1, padding=1,
                  groups=1, gb=1, apply_act=False)
    fmap.append(h)
    return h.reshape(h.shape[0], -1), fmap


def mpd_forward(packed, y, y_hat):
    B = y.shape[0]
    yy = jnp.concatenate([y, y_hat], axis=0)      # run real & generated in one batch
    y_d_rs, y_d_gs, fmap_rs, fmap_gs = [], [], [], []

    score, fmaps = disc_s_forward(packed["s"], yy)
    y_d_rs.append(score[:B]); y_d_gs.append(score[B:])
    fmap_rs.append([f[:B] for f in fmaps]); fmap_gs.append([f[B:] for f in fmaps])

    for period, pp in zip(PERIODS, packed["p"]):
        score, fmaps = disc_p_forward(pp, period, yy)
        y_d_rs.append(score[:B]); y_d_gs.append(score[B:])
        fmap_rs.append([f[:B] for f in fmaps])
        fmap_gs.append([f[B:] for f in fmaps])
    return y_d_rs, y_d_gs, fmap_rs, fmap_gs


# ---------------------------------- main ------------------------------------ #
if __name__ == "__main__":
    key = jax.random.PRNGKey(0)
    kp, ky, kh, kc1, kc2 = jax.random.split(key, 5)
    raw = init_mpd(kp)
    packed = pack_mpd(raw)

    B, C, T = 2, 1, 256
    y = jax.random.normal(ky, (B, C, T), jnp.float32)
    y_hat = jax.random.normal(kh, (B, C, T), jnp.float32)

    # ----- sanity checks of the fused conv kernel against lax conv ----- #
    def ref_conv1d(x, w, b, stride, pad, groups, act):
        o = lax.conv_general_dilated(
            x, w, (stride,), [(pad, pad)],
            dimension_numbers=("NCH", "OIH", "NCH"),
            feature_group_count=groups)
        o = o + b[None, :, None]
        return jnp.where(o >= 0, o, LRELU_SLOPE * o) if act else o

    def as_f32_bf16(a):
        return a.astype(jnp.bfloat16).astype(jnp.float32)

    # (a) dense K=15 conv (CpS == 1)
    w0, b0 = raw["s"]["convs"][0]
    got = conv_kx1(y[..., None], w0, b0, 1, 7, 1, True)[..., 0]
    ref = ref_conv1d(as_f32_bf16(y), as_f32_bf16(w0), b0, 1, 7, 1, True)
    np.testing.assert_allclose(np.asarray(got.astype(jnp.float32)),
                               np.asarray(ref), rtol=2e-2, atol=2e-2)

    # (b) grouped strided conv (K=41, stride 4, groups 4) -> block-diagonal path
    x1 = jax.random.normal(kc1, (B, 16, 64), jnp.float32)
    w1, b1 = raw["s"]["convs"][1]
    got = conv_kx1(x1[..., None], w1, b1, 4, 20, 4, True)[..., 0]
    ref = ref_conv1d(as_f32_bf16(x1), as_f32_bf16(w1), b1, 4, 20, 4, True)
    np.testing.assert_allclose(np.asarray(got.astype(jnp.float32)),
                               np.asarray(ref), rtol=2e-2, atol=2e-2)

    # (c) period-style 2-D conv: kernel (5,1), stride (3,1) over (B, C, H, W)
    x2 = jax.random.normal(kc2, (B, 32, 12, 11), jnp.float32)
    w2, b2 = raw["p"][0]["convs"][1]
    got = conv_kx1(x2, w2, b2, 3, 2, 1, True)
    ref = lax.conv_general_dilated(
        as_f32_bf16(x2), as_f32_bf16(w2)[..., None], (3, 1), [(2, 2), (0, 0)],
        dimension_numbers=("NCHW", "OIHW", "NCHW"))
    ref = ref + b2[None, :, None, None]
    ref = jnp.where(ref >= 0, ref, LRELU_SLOPE * ref)
    np.testing.assert_allclose(np.asarray(got.astype(jnp.float32)),
                               np.asarray(ref), rtol=2e-2, atol=2e-2)

    # ----- full multi-period discriminator forward ----- #
    out = jax.jit(mpd_forward)(packed, y, y_hat)
    jax.block_until_ready(out)
    print("KERNEL_OK")
</pallas_src>

<mosaic_0001>
module attributes {stable_mosaic.version = 11 : i64} {
  func.func @_conv_kernel(%arg0: i32, %arg1: i32, %arg2: memref<1x16x15xbf16, #tpu.memory_space<vmem>>, %arg3: memref<1x16x1xf32, #tpu.memory_space<vmem>>, %arg4: memref<1x1x256xbf16, #tpu.memory_space<vmem>>, %arg5: memref<1x1x128xbf16, #tpu.memory_space<vmem>>, %arg6: memref<1x16x256xbf16, #tpu.memory_space<vmem>>) attributes {dimension_semantics = [#tpu.dimension_semantics<parallel>, #tpu.dimension_semantics<parallel>], iteration_bounds = array<i64: 2, 1>, scalar_prefetch = 0 : i64, scratch_operands = 0 : i64, tpu.core_type = #tpu.core_type<tc>, window_params = [{pipeline_mode = #tpu.pipeline_mode<synchronous>, transform_indices = @transform_0, window_bounds = array<i64: 1, 16, 15>}, {pipeline_mode = #tpu.pipeline_mode<synchronous>, transform_indices = @transform_1, window_bounds = array<i64: 1, 16, 1>}, {transform_indices = @transform_2, window_bounds = array<i64: 1, 1, 256>}, {transform_indices = @transform_3, window_bounds = array<i64: 1, 1, 128>}, {transform_indices = @transform_4, window_bounds = array<i64: 1, 16, 256>}]} {
    %c0 = arith.constant 0 : index
    %c0_0 = arith.constant 0 : index
    %c0_1 = arith.constant 0 : index
    %0 = vector.load %arg4[%c0, %c0_0, %c0_1] : memref<1x1x256xbf16, #tpu.memory_space<vmem>>, vector<1x1x256xbf16>
    %c0_2 = arith.constant 0 : index
    %c0_3 = arith.constant 0 : index
    %c0_4 = arith.constant 0 : index
    %1 = vector.load %arg5[%c0_2, %c0_3, %c0_4] : memref<1x1x128xbf16, #tpu.memory_space<vmem>>, vector<1x1x128xbf16>
    %2 = tpu.concatenate %0, %1 in 2 : vector<1x1x256xbf16>, vector<1x1x128xbf16> -> vector<1x1x384xbf16>
    %3 = vector.extract_strided_slice %2 {offsets = [0, 0, 0], sizes = [1, 1, 256], strides = [1, 1, 1]} : vector<1x1x384xbf16> to vector<1x1x256xbf16>
    %4 = vector.extract_strided_slice %2 {offsets = [0, 0, 1], sizes = [1, 1, 256], strides = [1, 1, 1]} : vector<1x1x384xbf16> to vector<1x1x256xbf16>
    %5 = vector.extract_strided_slice %2 {offsets = [0, 0, 2], sizes = [1, 1, 256], strides = [1, 1, 1]} : vector<1x1x384xbf16> to vector<1x1x256xbf16>
    %6 = vector.extract_strided_slice %2 {offsets = [0, 0, 3], sizes = [1, 1, 256], strides = [1, 1, 1]} : vector<1x1x384xbf16> to vector<1x1x256xbf16>
    %7 = vector.extract_strided_slice %2 {offsets = [0, 0, 4], sizes = [1, 1, 256], strides = [1, 1, 1]} : vector<1x1x384xbf16> to vector<1x1x256xbf16>
    %8 = vector.extract_strided_slice %2 {offsets = [0, 0, 5], sizes = [1, 1, 256], strides = [1, 1, 1]} : vector<1x1x384xbf16> to vector<1x1x256xbf16>
    %9 = vector.extract_strided_slice %2 {offsets = [0, 0, 6], sizes = [1, 1, 256], strides = [1, 1, 1]} : vector<1x1x384xbf16> to vector<1x1x256xbf16>
    %10 = vector.extract_strided_slice %2 {offsets = [0, 0, 7], sizes = [1, 1, 256], strides = [1, 1, 1]} : vector<1x1x384xbf16> to vector<1x1x256xbf16>
    %11 = vector.extract_strided_slice %2 {offsets = [0, 0, 8], sizes = [1, 1, 256], strides = [1, 1, 1]} : vector<1x1x384xbf16> to vector<1x1x256xbf16>
    %12 = vector.extract_strided_slice %2 {offsets = [0, 0, 9], sizes = [1, 1, 256], strides = [1, 1, 1]} : vector<1x1x384xbf16> to vector<1x1x256xbf16>
    %13 = vector.extract_strided_slice %2 {offsets = [0, 0, 10], sizes = [1, 1, 256], strides = [1, 1, 1]} : vector<1x1x384xbf16> to vector<1x1x256xbf16>
    %14 = vector.extract_strided_slice %2 {offsets = [0, 0, 11], sizes = [1, 1, 256], strides = [1, 1, 1]} : vector<1x1x384xbf16> to vector<1x1x256xbf16>
    %15 = vector.extract_strided_slice %2 {offsets = [0, 0, 12], sizes = [1, 1, 256], strides = [1, 1, 1]} : vector<1x1x384xbf16> to vector<1x1x256xbf16>
    %16 = vector.extract_strided_slice %2 {offsets = [0, 0, 13], sizes = [1, 1, 256], strides = [1, 1, 1]} : vector<1x1x384xbf16> to vector<1x1x256xbf16>
    %17 = vector.extract_strided_slice %2 {offsets = [0, 0, 14], sizes = [1, 1, 256], strides = [1, 1, 1]} : vector<1x1x384xbf16> to vector<1x1x256xbf16>
    %18 = vector.shape_cast %3 : vector<1x1x256xbf16> to vector<1x1x1x256xbf16>
    %19 = vector.shape_cast %4 : vector<1x1x256xbf16> to vector<1x1x1x256xbf16>
    %20 = vector.shape_cast %5 : vector<1x1x256xbf16> to vector<1x1x1x256xbf16>
    %21 = vector.shape_cast %6 : vector<1x1x256xbf16> to vector<1x1x1x256xbf16>
    %22 = vector.shape_cast %7 : vector<1x1x256xbf16> to vector<1x1x1x256xbf16>
    %23 = vector.shape_cast %8 : vector<1x1x256xbf16> to vector<1x1x1x256xbf16>
    %24 = vector.shape_cast %9 : vector<1x1x256xbf16> to vector<1x1x1x256xbf16>
    %25 = vector.shape_cast %10 : vector<1x1x256xbf16> to vector<1x1x1x256xbf16>
    %26 = vector.shape_cast %11 : vector<1x1x256xbf16> to vector<1x1x1x256xbf16>
    %27 = vector.shape_cast %12 : vector<1x1x256xbf16> to vector<1x1x1x256xbf16>
    %28 = vector.shape_cast %13 : vector<1x1x256xbf16> to vector<1x1x1x256xbf16>
    %29 = vector.shape_cast %14 : vector<1x1x256xbf16> to vector<1x1x1x256xbf16>
    %30 = vector.shape_cast %15 : vector<1x1x256xbf16> to vector<1x1x1x256xbf16>
    %31 = vector.shape_cast %16 : vector<1x1x256xbf16> to vector<1x1x1x256xbf16>
    %32 = vector.shape_cast %17 : vector<1x1x256xbf16> to vector<1x1x1x256xbf16>
    %33 = tpu.concatenate %18, %19, %20, %21, %22, %23, %24, %25, %26, %27, %28, %29, %30, %31, %32 in 1 : vector<1x1x1x256xbf16>, vector<1x1x1x256xbf16>, vector<1x1x1x256xbf16>, vector<1x1x1x256xbf16>, vector<1x1x1x256xbf16>, vector<1x1x1x256xbf16>, vector<1x1x1x256xbf16>, vector<1x1x1x256xbf16>, vector<1x1x1x256xbf16>, vector<1x1x1x256xbf16>, vector<1x1x1x256xbf16>, vector<1x1x1x256xbf16>, vector<1x1x1x256xbf16>, vector<1x1x1x256xbf16>, vector<1x1x1x256xbf16> -> vector<1x15x1x256xbf16>
    %34 = vector.shape_cast %33 : vector<1x15x1x256xbf16> to vector<15x256xbf16>
    %c0_5 = arith.constant 0 : index
    %c0_6 = arith.constant 0 : index
    %c0_7 = arith.constant 0 : index
    %35 = vector.load %arg2[%c0_5, %c0_6, %c0_7] : memref<1x16x15xbf16, #tpu.memory_space<vmem>>, vector<1x16x15xbf16>
    %36 = vector.shape_cast %35 : vector<1x16x15xbf16> to vector<16x15xbf16>
    %cst = arith.constant dense<0.000000e+00> : vector<16x256xf32>
    %37 = tpu.matmul %36, %34, %cst {dimension_numbers = #tpu.dot_dimension_numbers<[1], [0], [0], [1], [0, 0, 1, 1], [], []>} : vector<16x15xbf16>, vector<15x256xbf16>, vector<16x256xf32> -> vector<16x256xf32>
    %c0_8 = arith.constant 0 : index
    %c0_9 = arith.constant 0 : index
    %c0_10 = arith.constant 0 : index
    %38 = vector.load %arg3[%c0_8, %c0_9, %c0_10] : memref<1x16x1xf32, #tpu.memory_space<vmem>>, vector<1x16x1xf32>
    %39 = vector.shape_cast %38 : vector<1x16x1xf32> to vector<16x1xf32>
    %40 = vector.broadcast %39 : vector<16x1xf32> to vector<16x256xf32>
    %41 = arith.addf %37, %40 : vector<16x256xf32>
    %cst_11 = arith.constant 0.000000e+00 : f32
    %42 = vector.broadcast %cst_11 : f32 to vector<16x256xf32>
    %43 = arith.cmpf oge, %41, %42 : vector<16x256xf32>
    %cst_12 = arith.constant 1.000000e-01 : f32
    %44 = vector.broadcast %cst_12 : f32 to vector<16x256xf32>
    %45 = arith.mulf %41, %44 : vector<16x256xf32>
    %46 = arith.select %43, %41, %45 : vector<16x256xi1>, vector<16x256xf32>
    %47 = arith.truncf %46 : vector<16x256xf32> to vector<16x256xbf16>
    %c0_13 = arith.constant 0 : index
    %c0_14 = arith.constant 0 : index
    %c0_15 = arith.constant 0 : index
    %48 = vector.load %arg6[%c0_13, %c0_14, %c0_15] : memref<1x16x256xbf16, #tpu.memory_space<vmem>>, vector<1x16x256xbf16>
    %49 = vector.shape_cast %48 : vector<1x16x256xbf16> to vector<16x256xbf16>
    %50 = vector.shape_cast %47 : vector<16x256xbf16> to vector<1x16x256xbf16>
    tpu.vector_store %arg6[%c0_13, %c0_14, %c0_15], %50 {strides = array<i32>} : memref<1x16x256xbf16, #tpu.memory_space<vmem>>, vector<1x16x256xbf16>,
    return
  }
  func.func @transform_0(%arg0: i32, %arg1: i32) -> (i32, i32, i32) {
    %c0_i32 = arith.constant 0 : i32
    %c0_i32_0 = arith.constant 0 : i32
    %c0_i32_1 = arith.constant 0 : i32
    %c0_i32_2 = arith.constant 0 : i32
    return %c0_i32, %c0_i32_0, %c0_i32_1 : i32, i32, i32
  }
  func.func @transform_1(%arg0: i32, %arg1: i32) -> (i32, i32, i32) {
    %c0_i32 = arith.constant 0 : i32
    %c0_i32_0 = arith.constant 0 : i32
    %c0_i32_1 = arith.constant 0 : i32
    %c0_i32_2 = arith.constant 0 : i32
    return %c0_i32, %c0_i32_0, %c0_i32_1 : i32, i32, i32
  }
  func.func @transform_2(%arg0: i32, %arg1: i32) -> (i32, i32, i32) {
    %c0_i32 = arith.constant 0 : i32
    %c0_i32_0 = arith.constant 0 : i32
    return %arg0, %c0_i32, %arg1 : i32, i32, i32
  }
  func.func @transform_3(%arg0: i32, %arg1: i32) -> (i32, i32, i32) {
    %c1_i32 = arith.constant 1 : i32
    %0 = arith.addi %arg1, %c1_i32 : i32
    %c2_i32 = arith.constant 2 : i32
    %1 = arith.muli %0, %c2_i32 : i32
    %c0_i32 = arith.constant 0 : i32
    %c0_i32_0 = arith.constant 0 : i32
    return %arg0, %c0_i32, %1 : i32, i32, i32
  }
  func.func @transform_4(%arg0: i32, %arg1: i32) -> (i32, i32, i32) {
    %c0_i32 = arith.constant 0 : i32
    %c0_i32_0 = arith.constant 0 : i32
    return %arg0, %c0_i32, %arg1 : i32, i32, i32
  }
}

</mosaic_0001>

<llo_original>
// kernel: tpu_custom_call.1
$region0: #{tpu_custom_call.1}
  #allocation0 [shape = 'u32[]', space=smem, size = 0x4, offset = 0x4, fixed_abs, tag = 'smem constant byte address 0x4 - core index']
  #allocation1 [shape = 'u32[144,128]{1,0:T(1,128)}', space=vmem, size = 0x12000, scoped, tag = 'internal scratch']
  %s0 = inlined_call_operand.vmem [shape: bf16[1,16,15], index: 0, kind: input, shape index: {}]
  %s1 = inlined_call_operand.vmem [shape: f32[1,16,1], index: 1, kind: input, shape index: {}]
  %s2 = inlined_call_operand.vmem [shape: bf16[2,1,384], index: 2, kind: input, shape index: {}]
  %s3 = inlined_call_operand.vmem [shape: bf16[2,1,384], index: 3, kind: input, shape index: {}]
  %s4 = inlined_call_operand.hbm [shape: bf16[2,16,256], index: 4, kind: output, shape index: {}]
  %s5 = sld [smem:[#allocation0]]
  $region49: #{tpu_custom_call.1} parent=0
    _
  %s7 = ssub.s32 1, %s5
  %s8 = scalar_select 0, %s7, %s5
  $region1: #{tpu_custom_call.1} parent=0
    #allocation2 [shape = 'u8[16384]{0}', space=vmem, size = 0x4000, scoped, tag = 'output window, operand 0']
    #allocation3 [shape = 's32[2]{0}', space=sflag, size = 0x8, scoped, tag = 'scoped memory for tpu_custom_call.1']
    %9 = vsyncpa [#allocation3], 0
    %s10 = scalar_lea.sflag [#allocation3], 1
    %11 = vsyncpa %s10, 0
    loop: start=0, step=1, limit=4
    $region2: #{tpu_custom_call.1} parent=1 // loop_pre_header
      _
    $region3: #{tpu_custom_call.1} parent=1 // loop_header
      %s13 = sphi 0, %s17
      %p14 = scmp.ge.s32.totalorder %s13, 4
      %s20 = sphi 0, %s32
      %s21 = sphi 0, %s28
      %s22 = sphi 0, %s20
      %s23 = sphi 0, %s21
      %s24 = sphi 0, %s22
      %s25 = sphi 0, %s23
      %s33 = sphi 0, %s33
      %s35 = sphi 0, %s33
      %s36 = sphi 0, %s35
      %s50 = sphi 0, %s36
      %s54 = sphi 0, %s54
      %s56 = sphi 0, %s54
      %s57 = sphi 0, %s56
      %s71 = sphi 0, %s57
      %s79 = sphi 0, %s81
      %s82 = sphi 0, %s79
      %s83 = sphi 0, %s82
      %s99 = sphi 0, %s83
      %s111 = sphi 0, %s113
      %s114 = sphi 0, %s111
      %s115 = sphi 0, %s114
      %s131 = sphi 0, %s115
      %s139 = sphi 0, %s141
      %s142 = sphi 0, %s139
      %s143 = sphi 0, %s142
      %s159 = sphi 0, %s143
    $region4: #{tpu_custom_call.1} parent=1 // loop_header_branch
      %16 = sbr.rel (%p14) target = $region8
    $region5: #{tpu_custom_call.1} parent=1 // loop_body
      %s18 = ssub.s32 %s13, 1
      %s19 = ssub.s32 %s13, 2
      %s26 = sadd.s32 1, %s21
      %p27 = scmp.ge.s32.totalorder %s26, 1
      %s28 = scalar_select %p27, 0, %s26
      %s29 = sadd.s32 1, %s20
      %s30 = scalar_select %p27, %s29, %s20
      %p31 = scmp.ge.s32.totalorder %s30, 2
      %s32 = scalar_select %p31, 0, %s30
      %s34 = sadd.s32 %s33, 1
      %p37 = scmp.eq.s32.totalorder %s13, 1
      %p38 = scmp.ne.s32.totalorder %s33, %s35
      %p39 = scmp.eq.s32.totalorder %s13, 0
      %p40 = por %p38, %p39
      %p41 = scmp.ne.s32.totalorder %s33, %s35
      %p42 = scmp.eq.s32.totalorder %s18, 1
      %p43 = por %p41, %p42
      %p44 = scmp.ne.s32.totalorder %s35, %s36
      %p45 = scmp.eq.s32.totalorder %s18, 0
      %p46 = por %p44, %p45
      %p47 = scmp.ne.s32.totalorder %s35, %s36
      %p48 = scmp.eq.s32.totalorder %s19, 1
      %p49 = por %p47, %p48
      %p51 = scmp.ne.s32.totalorder %s36, %s50
      %p52 = scmp.eq.s32.totalorder %s19, 0
      %p53 = por %p51, %p52
      %s55 = sadd.s32 %s54, 1
      %p58 = scmp.eq.s32.totalorder %s13, 1
      %p59 = scmp.ne.s32.totalorder %s54, %s56
      %p60 = scmp.eq.s32.totalorder %s13, 0
      %p61 = por %p59, %p60
      %p62 = scmp.ne.s32.totalorder %s54, %s56
      %p63 = scmp.eq.s32.totalorder %s18, 1
      %p64 = por %p62, %p63
      %p65 = scmp.ne.s32.totalorder %s56, %s57
      %p66 = scmp.eq.s32.totalorder %s18, 0
      %p67 = por %p65, %p66
      %p68 = scmp.ne.s32.totalorder %s56, %s57
      %p69 = scmp.eq.s32.totalorder %s19, 1
      %p70 = por %p68, %p69
      %p72 = scmp.ne.s32.totalorder %s57, %s71
      %p73 = scmp.eq.s32.totalorder %s19, 0
      %p74 = por %p72, %p73
      %s75 = ssub.s32 %s20, %s32
      %s76 = ssub.s32 %s21, %s28
      %s77 = sor.u32 %s75, %s76
      %p78 = scmp.eq.s32.totalorder %s77, 0
      %s80 = sadd.s32 %s79, 1
      %s81 = scalar_select %p78, %s79, %s80
      %p84 = pneg %p78
      %p85 = scmp.eq.s32.totalorder %s13, 1
      %p86 = por %p84, %p85
      %p87 = scmp.ne.s32.totalorder %s79, %s82
      %p88 = scmp.eq.s32.totalorder %s13, 0
      %p89 = por %p87, %p88
      %p90 = scmp.ne.s32.totalorder %s79, %s82
      %p91 = scmp.eq.s32.totalorder %s18, 1
      %p92 = por %p90, %p91
      %p93 = scmp.ne.s32.totalorder %s82, %s83
      %p94 = scmp.eq.s32.totalorder %s18, 0
      %p95 = por %p93, %p94
      %p96 = scmp.ne.s32.totalorder %s82, %s83
      %p97 = scmp.eq.s32.totalorder %s19, 1
      %p98 = por %p96, %p97
      %p100 = scmp.ne.s32.totalorder %s83, %s99
      %p101 = scmp.eq.s32.totalorder %s19, 0
      %p102 = por %p100, %p101
      %s103 = sadd.s32 %s21, 1
      %s104 = smul.u32 %s103, 2
      %s105 = sadd.s32 %s28, 1
      %s106 = smul.u32 %s105, 2
      %s107 = ssub.s32 %s20, %s32
      %s108 = ssub.s32 %s104, %s106
      %s109 = sor.u32 %s107, %s108
      %p110 = scmp.eq.s32.totalorder %s109, 0
      %s112 = sadd.s32 %s111, 1
      %s113 = scalar_select %p110, %s111, %s112
      %p116 = pneg %p110
      %p117 = scmp.eq.s32.totalorder %s13, 1
      %p118 = por %p116, %p117
      %p119 = scmp.ne.s32.totalorder %s111, %s114
      %p120 = scmp.eq.s32.totalorder %s13, 0
      %p121 = por %p119, %p120
      %p122 = scmp.ne.s32.totalorder %s111, %s114
      %p123 = scmp.eq.s32.totalorder %s18, 1
      %p124 = por %p122, %p123
      %p125 = scmp.ne.s32.totalorder %s114, %s115
      %p126 = scmp.eq.s32.totalorder %s18, 0
      %p127 = por %p125, %p126
      %p128 = scmp.ne.s32.totalorder %s114, %s115
      %p129 = scmp.eq.s32.totalorder %s19, 1
      %p130 = por %p128, %p129
      %p132 = scmp.ne.s32.totalorder %s115, %s131
      %p133 = scmp.eq.s32.totalorder %s19, 0
      %p134 = por %p132, %p133
      %s135 = ssub.s32 %s20, %s32
      %s136 = ssub.s32 %s21, %s28
      %s137 = sor.u32 %s135, %s136
      %p138 = scmp.eq.s32.totalorder %s137, 0
      %s140 = sadd.s32 %s139, 1
      %s141 = scalar_select %p138, %s139, %s140
      %p144 = pneg %p138
      %p145 = scmp.eq.s32.totalorder %s13, 1
      %p146 = por %p144, %p145
      %p147 = scmp.ne.s32.totalorder %s139, %s142
      %p148 = scmp.eq.s32.totalorder %s13, 0
      %p149 = por %p147, %p148
      %p150 = scmp.ne.s32.totalorder %s139, %s142
      %p151 = scmp.eq.s32.totalorder %s18, 1
      %p152 = por %p150, %p151
      %p153 = scmp.ne.s32.totalorder %s142, %s143
      %p154 = scmp.eq.s32.totalorder %s18, 0
      %p155 = por %p153, %p154
      %p156 = scmp.ne.s32.totalorder %s142, %s143
      %p157 = scmp.eq.s32.totalorder %s19, 1
      %p158 = por %p156, %p157
      %p160 = scmp.ne.s32.totalorder %s143, %s159
      %p161 = scmp.eq.s32.totalorder %s19, 0
      %p162 = por %p160, %p161
      %p163 = scmp.le.s32.totalorder 1, %s13
      %p164 = scmp.lt.s32.totalorder %s13, 3
      %p165 = pnand %p163, %p164
      %p166 = pneg %p165
      // Predicated region
      $region9: #{tpu_custom_call.1} parent=5 // pred_check
        _
      $region10: #{tpu_custom_call.1} parent=5 // pred_check_branch
        %168 = sbr.rel (%p165) target = $region12
      $region11: #{tpu_custom_call.1} parent=5 // pred_region
        %s169 = ssub.s32 %s13, 1
        // Predicated region
        $region13: #{tpu_custom_call.1} parent=11 // pred_check
          %p170 = pneg %p46
        $region14: #{tpu_custom_call.1} parent=11 // pred_check_branch
          %172 = sbr.rel (%p170) target = $region16
        $region15: #{tpu_custom_call.1} parent=11 // pred_region
          _
        $region16: #{tpu_custom_call.1} parent=11 // pred_fallthru
          _
        // Predicated region
        $region17: #{tpu_custom_call.1} parent=11 // pred_check
          %p173 = pneg %p67
        $region18: #{tpu_custom_call.1} parent=11 // pred_check_branch
          %175 = sbr.rel (%p173) target = $region20
        $region19: #{tpu_custom_call.1} parent=11 // pred_region
          _
        $region20: #{tpu_custom_call.1} parent=11 // pred_fallthru
          _
      $region12: #{tpu_custom_call.1} parent=5 // pred_fallthru
        _
      %p176 = scmp.lt.s32.totalorder %s13, 2
      // Predicated region
      $region21: #{tpu_custom_call.1} parent=5 // pred_check
        %p177 = pneg %p176
      $region22: #{tpu_custom_call.1} parent=5 // pred_check_branch
        %179 = sbr.rel (%p177) target = $region24
      $region23: #{tpu_custom_call.1} parent=5 // pred_region
        // Predicated region
        $region25: #{tpu_custom_call.1} parent=23 // pred_check
          %p180 = pneg %p89
        $region26: #{tpu_custom_call.1} parent=23 // pred_check_branch
          %182 = sbr.rel (%p180) target = $region28
        $region27: #{tpu_custom_call.1} parent=23 // pred_region
          %s183 = smul.u32 2, %s21
          %s184 = ssub.s32 3, %s183
          %p185 = scmp.lt.s32.totalorder %s184, 2
          %s186 = scalar_select %p185, %s184, 2
          %s187 = smul.u32 16, %s186
          %p188 = scmp.lt.s32.totalorder %s20, 1
          %s189 = scalar_select %p188, %s20, 1
          %p190 = scmp.lt.s32.totalorder %s183, 2
          %s191 = scalar_select %p190, %s183, 2
          %s192 = smul.addr %s189, 3
          %s193 = sadd.s32 %s191, %s192
          %s194 = scalar_lea.vmem %s2, %s193
          %s195 = smul.u32 2, %s21
          %s196 = ssub.s32 3, %s195
          %p197 = scmp.lt.s32.totalorder %s196, 2
          %s198 = scalar_select %p197, %s196, 2
          %s199 = smul.u32 16, %s198
        $region28: #{tpu_custom_call.1} parent=23 // pred_fallthru
          _
        // Predicated region
        $region29: #{tpu_custom_call.1} parent=23 // pred_check
          %p200 = pneg %p121
        $region30: #{tpu_custom_call.1} parent=23 // pred_check_branch
          %202 = sbr.rel (%p200) target = $region32
        $region31: #{tpu_custom_call.1} parent=23 // pred_region
          %s203 = sadd.s32 %s21, 1
          %s204 = smul.u32 %s203, 2
          %p205 = scmp.lt.s32.totalorder %s20, 1
          %s206 = scalar_select %p205, %s20, 1
          %p207 = scmp.lt.s32.totalorder %s204, 2
          %s208 = scalar_select %p207, %s204, 2
          %s209 = smul.addr %s206, 3
          %s210 = sadd.s32 %s208, %s209
          %s211 = scalar_lea.vmem %s3, %s210
          %s212 = sadd.s32 %s21, 1
          %s213 = smul.u32 %s212, 2
        $region32: #{tpu_custom_call.1} parent=23 // pred_fallthru
          _
      $region24: #{tpu_custom_call.1} parent=5 // pred_fallthru
        _
      %p214 = scmp.le.s32.totalorder 1, %s13
      %p215 = scmp.lt.s32.totalorder %s13, 3
      %p216 = pnand %p214, %p215
      %p217 = pneg %p216
      // Predicated region
      $region33: #{tpu_custom_call.1} parent=5 // pred_check
        _
      $region34: #{tpu_custom_call.1} parent=5 // pred_check_branch
        %219 = sbr.rel (%p216) target = $region36
      $region35: #{tpu_custom_call.1} parent=5 // pred_region
        %s220 = ssub.s32 %s13, 1
        %p221 = pneg %p46
        %p222 = pneg %p43
        %p223 = pneg %p67
        %p224 = pneg %p64
        %s225 = smul.u32 2, %s23
        %s226 = ssub.s32 3, %s225
        %p227 = scmp.lt.s32.totalorder %s226, 2
        %s228 = scalar_select %p227, %s226, 2
        %s229 = smul.u32 16, %s228
        %p230 = scmp.lt.s32.totalorder %s22, 1
        %s231 = scalar_select %p230, %s22, 1
        %p232 = scmp.lt.s32.totalorder %s225, 2
        %s233 = scalar_select %p232, %s225, 2
        %s234 = smul.addr %s231, 3
        %s235 = sadd.s32 %s233, %s234
        %s236 = scalar_lea.vmem %s2, %s235
        %p237 = pneg %p95
        %p238 = pneg %p92
        %s239 = sadd.s32 %s23, 1
        %s240 = smul.u32 %s239, 2
        %p241 = scmp.lt.s32.totalorder %s22, 1
        %s242 = scalar_select %p241, %s22, 1
        %p243 = scmp.lt.s32.totalorder %s240, 2
        %s244 = scalar_select %p243, %s240, 2
        %s245 = smul.addr %s242, 3
        %s246 = sadd.s32 %s244, %s245
        %s247 = scalar_lea.vmem %s3, %s246
        %p248 = pneg %p127
        %p249 = pneg %p124
        %p250 = pneg %p155
        %p251 = pneg %p152
        %s252 = sand.u32 %s142, 1
        %s253 = scalar_lea.sflag [#allocation3], %s252
        %s254 = sand.u32 %s142, 1
        %s255 = smul.addr %s254, 16
        %s256 = scalar_lea.vmem [#allocation2], %s255
        %s257 = smul.u32 2, %s23
        %s258 = ssub.s32 3, %s257
        %p259 = scmp.lt.s32.totalorder %s258, 2
        %s260 = scalar_select %p259, %s258, 2
        %s261 = smul.u32 16, %s260
        %p262 = scmp.lt.s32.totalorder %s22, 1
        %s263 = scalar_select %p262, %s22, 1
        %p264 = scmp.lt.s32.totalorder %s257, 2
        %s265 = scalar_select %p264, %s257, 2
        %s266 = smul.addr %s263, 3
        %s267 = sadd.s32 %s265, %s266
        %s268 = scalar_lea.vmem %s2, %s267
        %s269 = smul.u32 2, %s23
        %s270 = ssub.s32 3, %s269
        %p271 = scmp.lt.s32.totalorder %s270, 2
        %s272 = scalar_select %p271, %s270, 2
        %s273 = smul.u32 16, %s272
        %s274 = sadd.s32 %s23, 1
        %s275 = smul.u32 %s274, 2
        %p276 = scmp.lt.s32.totalorder %s22, 1
        %s277 = scalar_select %p276, %s22, 1
        %p278 = scmp.lt.s32.totalorder %s275, 2
        %s279 = scalar_select %p278, %s275, 2
        %s280 = smul.addr %s277, 3
        %s281 = sadd.s32 %s279, %s280
        %s282 = scalar_lea.vmem %s3, %s281
        %s283 = sadd.s32 %s23, 1
        %s284 = smul.u32 %s283, 2
        %s285 = smul.u32 2, %s23
        %v287 = vld [vmem:[%s268] sm:$0x3]
        %v288 = vld [vmem:[%s282] sm:$0x1]
        %v291 = vunpack.c.l.s4 1966171168
        %v292 = vunpack.c.0.s8 %v291
        %v293 = vlaneseq
        %v294 = vshrl.u32 %v293, 7
        %v295 = vsub.s32 %v292, %v294
        %v296 = vrot.slane %v287, %v295
        %v297 = vcombine.high %v296, %v296
        %v299 = vunpack.c.l.s4 1966171168
        %v300 = vunpack.c.0.s8 %v299
        %v301 = vlaneseq
        %v302 = vshrl.u32 %v301, 7
        %v303 = vsub.s32 %v300, %v302
        %v304 = vrot.slane %v296, %v303
        %v306 = vunpack.c.l.s4 1966171168
        %v307 = vunpack.c.0.s8 %v306
        %v308 = vlaneseq
        %v309 = vshrl.u32 %v308, 7
        %v310 = vsub.s32 %v307, %v309
        %v311 = vrot.slane %v297, %v310
        %313 = vrot.lane.b32.xlu0 %v304, 127
        %v314 = vpop.permute.xlu0 %313
        %315 = vrot.lane.b32.xlu0 %v311, 127
        %v316 = vpop.permute.xlu0 %315
        %317 = vrot.lane.b32.xlu0 %v288, 127
        %v318 = vpop.permute.xlu0 %317
        %vm319 = vcmask 1039360
        %v320 = vsel %vm319, %v314, %v316
        %v321 = vsel %vm319, %v316, %v318
        %322 = vrot.lane.b32.xlu0 %v304, 126
        %v323 = vpop.permute.xlu0 %322
        %324 = vrot.lane.b32.xlu0 %v311, 126
        %v325 = vpop.permute.xlu0 %324
        %326 = vrot.lane.b32.xlu0 %v288, 126
        %v327 = vpop.permute.xlu0 %326
        %vm328 = vcmask 1031168
        %v329 = vsel %vm328, %v323, %v325
        %v330 = vsel %vm328, %v325, %v327
        %331 = vrot.lane.b32.xlu0 %v304, 125
        %v332 = vpop.permute.xlu0 %331
        %333 = vrot.lane.b32.xlu0 %v311, 125
        %v334 = vpop.permute.xlu0 %333
        %335 = vrot.lane.b32.xlu0 %v288, 125
        %v336 = vpop.permute.xlu0 %335
        %vm337 = vcmask 1022976
        %v338 = vsel %vm337, %v332, %v334
        %v339 = vsel %vm337, %v334, %v336
        %340 = vrot.lane.b32.xlu0 %v304, 124
        %v341 = vpop.permute.xlu0 %340
        %342 = vrot.lane.b32.xlu0 %v311, 124
        %v343 = vpop.permute.xlu0 %342
        %344 = vrot.lane.b32.xlu0 %v288, 124
        %v345 = vpop.permute.xlu0 %344
        %vm346 = vcmask 1014784
        %v347 = vsel %vm346, %v341, %v343
        %v348 = vsel %vm346, %v343, %v345
        %349 = vrot.lane.b32.xlu0 %v304, 123
        %v350 = vpop.permute.xlu0 %349
        %351 = vrot.lane.b32.xlu0 %v311, 123
        %v352 = vpop.permute.xlu0 %351
        %353 = vrot.lane.b32.xlu0 %v288, 123
        %v354 = vpop.permute.xlu0 %353
        %vm355 = vcmask 1006592
        %v356 = vsel %vm355, %v350, %v352
        %v357 = vsel %vm355, %v352, %v354
        %358 = vrot.lane.b32.xlu0 %v304, 122
        %v359 = vpop.permute.xlu0 %358
        %360 = vrot.lane.b32.xlu0 %v311, 122
        %v361 = vpop.permute.xlu0 %360
        %362 = vrot.lane.b32.xlu0 %v288, 122
        %v363 = vpop.permute.xlu0 %362
        %vm364 = vcmask 998400
        %v365 = vsel %vm364, %v359, %v361
        %v366 = vsel %vm364, %v361, %v363
        %367 = vrot.lane.b32.xlu0 %v304, 121
        %v368 = vpop.permute.xlu0 %367
        %369 = vrot.lane.b32.xlu0 %v311, 121
        %v370 = vpop.permute.xlu0 %369
        %371 = vrot.lane.b32.xlu0 %v288, 121
        %v372 = vpop.permute.xlu0 %371
        %vm373 = vcmask 990208
        %v374 = vsel %vm373, %v368, %v370
        %v375 = vsel %vm373, %v370, %v372
        %376 = vrot.lane.b32.xlu0 %v304, 120
        %v377 = vpop.permute.xlu0 %376
        %378 = vrot.lane.b32.xlu0 %v311, 120
        %v379 = vpop.permute.xlu0 %378
        %380 = vrot.lane.b32.xlu0 %v288, 120
        %v381 = vpop.permute.xlu0 %380
        %vm382 = vcmask 982016
        %v383 = vsel %vm382, %v377, %v379
        %v384 = vsel %vm382, %v379, %v381
        %385 = vrot.lane.b32.xlu0 %v304, 119
        %v386 = vpop.permute.xlu0 %385
        %387 = vrot.lane.b32.xlu0 %v311, 119
        %v388 = vpop.permute.xlu0 %387
        %389 = vrot.lane.b32.xlu0 %v288, 119
        %v390 = vpop.permute.xlu0 %389
        %vm391 = vcmask 973824
        %v392 = vsel %vm391, %v386, %v388
        %v393 = vsel %vm391, %v388, %v390
        %394 = vrot.lane.b32.xlu0 %v304, 118
        %v395 = vpop.permute.xlu0 %394
        %396 = vrot.lane.b32.xlu0 %v311, 118
        %v397 = vpop.permute.xlu0 %396
        %398 = vrot.lane.b32.xlu0 %v288, 118
        %v399 = vpop.permute.xlu0 %398
        %vm400 = vcmask 965632
        %v401 = vsel %vm400, %v395, %v397
        %v402 = vsel %vm400, %v397, %v399
        %403 = vrot.lane.b32.xlu0 %v304, 117
        %v404 = vpop.permute.xlu0 %403
        %405 = vrot.lane.b32.xlu0 %v311, 117
        %v406 = vpop.permute.xlu0 %405
        %407 = vrot.lane.b32.xlu0 %v288, 117
        %v408 = vpop.permute.xlu0 %407
        %vm409 = vcmask 957440
        %v410 = vsel %vm409, %v404, %v406
        %v411 = vsel %vm409, %v406, %v408
        %412 = vrot.lane.b32.xlu0 %v304, 116
        %v413 = vpop.permute.xlu0 %412
        %414 = vrot.lane.b32.xlu0 %v311, 116
        %v415 = vpop.permute.xlu0 %414
        %416 = vrot.lane.b32.xlu0 %v288, 116
        %v417 = vpop.permute.xlu0 %416
        %vm418 = vcmask 949248
        %v419 = vsel %vm418, %v413, %v415
        %v420 = vsel %vm418, %v415, %v417
        %421 = vrot.lane.b32.xlu0 %v304, 115
        %v422 = vpop.permute.xlu0 %421
        %423 = vrot.lane.b32.xlu0 %v311, 115
        %v424 = vpop.permute.xlu0 %423
        %425 = vrot.lane.b32.xlu0 %v288, 115
        %v426 = vpop.permute.xlu0 %425
        %vm427 = vcmask 941056
        %v428 = vsel %vm427, %v422, %v424
        %v429 = vsel %vm427, %v424, %v426
        %430 = vrot.lane.b32.xlu0 %v304, 114
        %v431 = vpop.permute.xlu0 %430
        %432 = vrot.lane.b32.xlu0 %v311, 114
        %v433 = vpop.permute.xlu0 %432
        %434 = vrot.lane.b32.xlu0 %v288, 114
        %v435 = vpop.permute.xlu0 %434
        %vm436 = vcmask 932864
        %v437 = vsel %vm436, %v431, %v433
        %v438 = vsel %vm436, %v433, %v435
        %v439 = vld [vmem:[%s0] sm:$0xf]
        %v440 = vld [vmem:[%s0 + $0x4] sm:$0xf]
        %v441 = vld [vmem:[%s1] sm:$0xff]
        %v442 = vld [vmem:[%s1 + $0x8] sm:$0xff]
        %444 = vset.pattern.permute.xlu0 0
        %445 = vperm.xlu0 %444, %v441
        %v446 = vpop.permute.xlu0 %445
        %449 = vset.pattern.permute.xlu0 0
        %450 = vperm.xlu0 %449, %v442
        %v451 = vpop.permute.xlu0 %450
        %v455 = vunpack.c.l.b16 %v439
        %v456 = vunpack.c.l.b16 %v440
        %v457 = vpack.c.b16 %v456, %v455
        %v458 = vunpack.c.l.b16 %v304
        %v459 = vunpack.c.l.b16 %v311
        %v460 = vunpack.c.l.b16 %v320
        %v461 = vunpack.c.l.b16 %v321
        %v462 = vunpack.c.l.b16 %v329
        %v463 = vunpack.c.l.b16 %v330
        %v464 = vunpack.c.l.b16 %v338
        %v465 = vunpack.c.l.b16 %v339
        %v466 = vunpack.c.l.b16 %v347
        %v467 = vunpack.c.l.b16 %v348
        %v468 = vunpack.c.l.b16 %v356
        %v469 = vunpack.c.l.b16 %v357
        %v470 = vunpack.c.l.b16 %v365
        %v471 = vunpack.c.l.b16 %v366
        %v472 = vunpack.c.l.b16 %v374
        %v473 = vunpack.c.l.b16 %v375
        %v474 = vunpack.c.l.b16 %v383
        %v475 = vunpack.c.l.b16 %v384
        %v476 = vunpack.c.l.b16 %v392
        %v477 = vunpack.c.l.b16 %v393
        %v478 = vunpack.c.l.b16 %v401
        %v479 = vunpack.c.l.b16 %v402
        %v480 = vunpack.c.l.b16 %v410
        %v481 = vunpack.c.l.b16 %v411
        %v482 = vunpack.c.l.b16 %v419
        %v483 = vunpack.c.l.b16 %v420
        %v484 = vunpack.c.l.b16 %v428
        %v485 = vunpack.c.l.b16 %v429
        %v486 = vunpack.c.l.b16 %v437
        %v487 = vunpack.c.l.b16 %v438
        %v488 = vrot.slane %v460, 7
        %vm489 = vcmask 1041409
        %v490 = vsel %vm489, %v488, %v458
        %v491 = vrot.slane %v462, 6
        %vm492 = vcmask 1042434
        %v493 = vsel %vm492, %v491, %v490
        %v494 = vrot.slane %v464, 5
        %vm495 = vcmask 1043459
        %v496 = vsel %vm495, %v494, %v493
        %v497 = vrot.slane %v466, 4
        %vm498 = vcmask 1044484
        %v499 = vsel %vm498, %v497, %v496
        %v500 = vrot.slane %v468, 3
        %vm501 = vcmask 1045509
        %v502 = vsel %vm501, %v500, %v499
        %v503 = vrot.slane %v470, 2
        %vm504 = vcmask 1046534
        %v505 = vsel %vm504, %v503, %v502
        %v506 = vrot.slane %v472, 1
        %vm507 = vcmask 1047559
        %v508 = vsel %vm507, %v506, %v505
        %v509 = vrot.slane %v461, 7
        %v510 = vsel %vm489, %v509, %v459
        %v511 = vrot.slane %v463, 6
        %v512 = vsel %vm492, %v511, %v510
        %v513 = vrot.slane %v465, 5
        %v514 = vsel %vm495, %v513, %v512
        %v515 = vrot.slane %v467, 4
        %v516 = vsel %vm498, %v515, %v514
        %v517 = vrot.slane %v469, 3
        %v518 = vsel %vm501, %v517, %v516
        %v519 = vrot.slane %v471, 2
        %v520 = vsel %vm504, %v519, %v518
        %v521 = vrot.slane %v473, 1
        %v522 = vsel %vm507, %v521, %v520
        %v523 = vrot.slane %v476, 7
        %v524 = vsel %vm489, %v523, %v474
        %v525 = vrot.slane %v478, 6
        %v526 = vsel %vm492, %v525, %v524
        %v527 = vrot.slane %v480, 5
        %v528 = vsel %vm495, %v527, %v526
        %v529 = vrot.slane %v482, 4
        %v530 = vsel %vm498, %v529, %v528
        %v531 = vrot.slane %v484, 3
        %v532 = vsel %vm501, %v531, %v530
        %v533 = vrot.slane %v486, 2
        %v534 = vsel %vm504, %v533, %v532
        %v535 = vrot.slane %v477, 7
        %v536 = vsel %vm489, %v535, %v475
        %v537 = vrot.slane %v479, 6
        %v538 = vsel %vm492, %v537, %v536
        %v539 = vrot.slane %v481, 5
        %v540 = vsel %vm495, %v539, %v538
        %v541 = vrot.slane %v483, 4
        %v542 = vsel %vm498, %v541, %v540
        %v543 = vrot.slane %v485, 3
        %v544 = vsel %vm501, %v543, %v542
        %v545 = vrot.slane %v487, 2
        %v546 = vsel %vm504, %v545, %v544
        %v547 = vpack.c.b16 %v534, %v508
        %v548 = vpack.c.b16 %v546, %v522
        %vm549 = vcmask 121856
        %v551 = vsel %vm549, %v457, 0
        %vm553 = vcmask 1046528
        %vm554 = vcmask 1047552
        %v555 = vsel %vm553, 4294967295, 65535
        %v556 = vsel %vm554, %v555, 0
        %v558 = vand.u32 %v547, %v556
        %v561 = vand.u32 %v548, %v556
        %563 = vmatprep.subr.bf16.mxu0 0
        %564 = vmatpush1.bf16.msra.mxu0 0
        %565 = vmatprep.subr.bf16.mxu0 0
        %566 = vmatpush1.bf16.msra.mxu0 0
        %567 = vmatprep.subr.bf16.mxu0 0
        %568 = vmatpush1.bf16.msra.mxu0 0
        %569 = vmatprep.subr.bf16.mxu0 0
        %570 = vmatpush1.bf16.msra.mxu0 0
        %571 = vmatprep.subr.bf16.mxu0 0
        %572 = vmatpush1.bf16.msra.mxu0 0
        %573 = vmatprep.subr.bf16.mxu0 0
        %574 = vmatpush1.bf16.msra.mxu0 0
        %575 = vmatprep.subr.bf16.mxu0 0
        %576 = vmatpush1.bf16.msra.mxu0 0
        %577 = vmatprep.subr.bf16.mxu0 %v561
        %578 = vmatpush1.bf16.msra.mxu0 %v558
        %579 = vmatprep.subr.bf16.mxu0 0
        %580 = vmatpush2.bf16.msra.mxu0 0
        %581 = vmatprep.subr.bf16.mxu0 0
        %582 = vmatpush2.bf16.msra.mxu0 0
        %583 = vmatprep.subr.bf16.mxu0 0
        %584 = vmatpush2.bf16.msra.mxu0 0
        %585 = vmatprep.subr.bf16.mxu0 0
        %586 = vmatpush2.bf16.msra.mxu0 0
        %587 = vmatprep.subr.bf16.mxu0 0
        %588 = vmatpush2.bf16.msra.mxu0 0
        %589 = vmatprep.subr.bf16.mxu0 0
        %590 = vmatpush2.bf16.msra.mxu0 0
        %591 = vmatprep.subr.bf16.mxu0 0
        %592 = vmatpush2.bf16.msra.mxu0 0
        %593 = vmatprep.subr.bf16.mxu0 0
        %594 = vmatpush2.bf16.msra.mxu0 0
        %595 = vmatprep.mubr.bf16.mxu0 0
        %596 = vmatmul.mubr.bf16.gmra.mxu0 %v551
        %v597 = vpop.f32.mrf.mxu0
        %v598 = vadd.f32 %v446, %v597
        %v599 = vpop.f32.mrf.mxu0
        %v600 = vadd.f32 %v446, %v599
        %v601 = vpop.f32.mrf.mxu0
        %v602 = vadd.f32 %v451, %v601
        %v603 = vpop.f32.mrf.mxu0
        %v604 = vadd.f32 %v451, %v603
        %605 = vdwg.mxu0
        %vm606 = vcmp.ge.f32.partialorder %v598, 0.0
        %vm607 = vcmp.ge.f32.partialorder %v600, 0.0
        %vm608 = vcmp.ge.f32.partialorder %v602, 0.0
        %vm609 = vcmp.ge.f32.partialorder %v604, 0.0
        %v610 = vmul.f32 %v598, 0.1
        %v611 = vmul.f32 %v600, 0.1
        %v612 = vmul.f32 %v602, 0.1
        %v613 = vmul.f32 %v604, 0.1
        %v614 = vsel %vm606, %v598, %v610
        %v615 = vsel %vm607, %v600, %v611
        %v616 = vsel %vm608, %v602, %v612
        %v617 = vsel %vm609, %v604, %v613
        %v618 = vpack.c.bf16 %v616, %v614
        %v619 = vpack.c.bf16 %v617, %v615
        %v622 = vunpack.c.l.b16 %v618
        %v623 = vunpack.c.l.b16 %v619
        %v624 = vunpack.c.h.b16 %v618
        %v625 = vunpack.c.h.b16 %v619
        %v626 = vpack.c.b16 %v623, %v622
        %v627 = vpack.c.b16 %v625, %v624
        %630 = vst [vmem:[%s256] sm:$0xff] %v626
        %631 = vst [vmem:[%s256 + $0x8] sm:$0xff] %v627
        %s632 = sand.u32 %s142, 1
        %s633 = scalar_lea.sflag [#allocation3], %s632
        %s634 = sand.u32 %s142, 1
        %s635 = smul.addr %s634, 16
        %s636 = scalar_lea.vmem [#allocation2], %s635
        // Predicated region
        $region37: #{tpu_custom_call.1} parent=35 // pred_check
          %p637 = pneg %p152
        $region38: #{tpu_custom_call.1} parent=35 // pred_check_branch
          %639 = sbr.rel (%p637) target = $region40
        $region39: #{tpu_custom_call.1} parent=35 // pred_region
          %s640 = smul.u32 2, %s23
          %s642 = ssub.s32 256, 256
          %643 = vsyncadd %s633, %s642
          %s644 = smul.addr %s22, 4
          %s645 = sadd.s32 %s640, %s644
          %s646 = smul.addr %s645, 64
          %s647 = scalar_lea.hbm %s4, %s646
          %s648 = sshll.u32 %s636, 4
          %s649 = int_to_ptr.vmem [resolvable:$true] %s648
          %654 = dma.vmem_to_hbm [thread:$0]  %s649, 256, %s647, %s633, 128, 128, 8
        $region40: #{tpu_custom_call.1} parent=35 // pred_fallthru
          _
      $region36: #{tpu_custom_call.1} parent=5 // pred_fallthru
        _
      %p655 = scmp.le.s32.totalorder 2, %s13
      // Predicated region
      $region41: #{tpu_custom_call.1} parent=5 // pred_check
        %p656 = pneg %p655
      $region42: #{tpu_custom_call.1} parent=5 // pred_check_branch
        %658 = sbr.rel (%p656) target = $region44
      $region43: #{tpu_custom_call.1} parent=5 // pred_region
        %s659 = ssub.s32 %s13, 2
        // Predicated region
        $region45: #{tpu_custom_call.1} parent=43 // pred_check
          %p660 = pneg %p158
        $region46: #{tpu_custom_call.1} parent=43 // pred_check_branch
          %662 = sbr.rel (%p660) target = $region48
        $region47: #{tpu_custom_call.1} parent=43 // pred_region
          %s663 = sand.u32 %s143, 1
          %s664 = scalar_lea.sflag [#allocation3], %s663
          %s665 = sand.u32 %s143, 1
          %s666 = smul.addr %s665, 16
          %s667 = scalar_lea.vmem [#allocation2], %s666
          %668 = dma.done %s664, 256
        $region48: #{tpu_custom_call.1} parent=43 // pred_fallthru
          _
      $region44: #{tpu_custom_call.1} parent=5 // pred_fallthru
        _
    $region6: #{tpu_custom_call.1} parent=1 // loop_footer
      %s17 = sadd.s32 1, %s13
    $region7: #{tpu_custom_call.1} parent=1 // loop_footer_branch
      %12 = sbr.rel target = $region3
    $region8: #{tpu_custom_call.1} parent=1 // loop_exit
      _
    %669 = vsyncpa [#allocation3], 1
    %s670 = scalar_lea.sflag [#allocation3], 1
    %671 = vsyncpa %s670, 1

</llo_original>
